<compile_context>
chip_gen: v5e
topology: v5e:2x2
jax: 0.10.0
libtpu: 0.0.40
codegen_flags: <defaults>
</compile_context>

<pallas_src>
import functools
import math

import jax
import jax.numpy as jnp
from jax.experimental import pallas as pl
from jax.experimental.pallas import tpu as pltpu


def _embed_gather_kernel(ids_ref, w_hbm, o_ref, sem, *, scale, tm):
    """Gather `tm` embedding rows (ids from SMEM) straight into the output tile.

    ids_ref : (n_pad,) int32 in SMEM (scalar prefetch)
    w_hbm   : (vocab, d_pad) f32 table, left in HBM (memory_space=pl.ANY)
    o_ref   : (tm, d_pad) f32 output tile in VMEM
    sem     : single byte-counting DMA semaphore shared by all row copies
    """
    base = pl.program_id(0) * tm

    def row_copy(t):
        idx = ids_ref[base + t]
        return pltpu.make_async_copy(
            w_hbm.at[pl.ds(idx, 1), :],      # one table row in HBM
            o_ref.at[pl.ds(t, 1), :],        # directly into the output tile
            sem,
        )

    # Issue ALL tm row gathers before waiting on any of them: the gather is
    # purely HBM-bound, so the goal is maximum in-flight bytes.  Destinations
    # are disjoint output rows, so a single counting semaphore suffices.
    @pl.loop(0, tm)
    def _issue(t):
        row_copy(t).start()

    # Drain: one wait per issued copy, built from an identical (symmetric)
    # descriptor so byte counts always match.  After this loop every row of
    # the tile is resident in o_ref.
    @pl.loop(0, tm)
    def _drain(t):
        row_copy(t).wait()

    # Single dense, tile-wide sqrt(d_model) scaling (free VPU work under the
    # DMA bottleneck; full vregs, unmasked vst).
    o_ref[...] = o_ref[...] * scale


def embeddings_forward(x_ids, weight, d_model, *, token_tile=512):
    """Equivalent of `nn.Embedding(vocab, d_model, padding_idx)(x) * sqrt(d_model)`.

    x_ids : (B, S) int token ids
    weight: (vocab, d_model) f32 embedding table (padding_idx row already zero)
    """
    B, S = x_ids.shape
    vocab, dm = weight.shape
    assert dm == d_model

    N = B * S

    # Large tiles amortize the per-grid-step overhead; shrink for tiny inputs.
    # (Double-buffered output block = 2*tm*d_pad*4 B; at tm=512, d_model=4096
    # that is 16 MiB — fits the default scoped VMEM on every generation.)
    tm = min(token_tile, pl.cdiv(N, 8) * 8)
    n_pad = pl.cdiv(N, tm) * tm

    # Lane-dense output: pad d_model to a multiple of 128 lanes only if needed.
    # Production callers with d_model % 128 != 0 should pre-pad the table once
    # at init (jnp.pad here copies the whole table through HBM per call).
    d_pad = pl.cdiv(d_model, 128) * 128
    w = weight if d_pad == d_model else jnp.pad(
        weight, ((0, 0), (0, d_pad - d_model)))

    # Flattened ids padded with 0; padded tail rows are sliced off afterwards.
    ids_flat = jnp.zeros((n_pad,), jnp.int32).at[:N].set(
        x_ids.reshape(-1).astype(jnp.int32))

    kernel = functools.partial(
        _embed_gather_kernel, scale=float(math.sqrt(d_model)), tm=tm)

    out_flat = pl.pallas_call(
        kernel,
        out_shape=jax.ShapeDtypeStruct((n_pad, d_pad), jnp.float32),
        grid_spec=pltpu.PrefetchScalarGridSpec(
            num_scalar_prefetch=1,                  # ids -> SMEM scalars
            grid=(n_pad // tm,),
            in_specs=[
                pl.BlockSpec(memory_space=pl.ANY),  # table stays in HBM
            ],
            out_specs=pl.BlockSpec((tm, d_pad), lambda i, ids: (i, 0)),
            scratch_shapes=[
                pltpu.SemaphoreType.DMA,            # one counting DMA sem
            ],
        ),
        compiler_params=pltpu.CompilerParams(
            dimension_semantics=("parallel",)),     # v7x: tiles over both TCs
    )(ids_flat, w)

    return out_flat[:N, :d_model].reshape(B, S, d_model)


def make_embedding_weight(key, vocab, d_model, padding_idx):
    # Deterministic synthetic init matching nn.Embedding's N(0,1) init with the
    # padding_idx row zeroed (PyTorch's forward just reads the zeroed row).
    w = jax.random.normal(key, (vocab, d_model), dtype=jnp.float32)
    return w.at[padding_idx].set(0.0)


if __name__ == "__main__":
    # Small, module-consistent shapes.
    d_model = 32
    vocab = 64
    padding_idx = 0
    B, S = 2, 8

    key = jax.random.PRNGKey(0)
    k_w, k_x = jax.random.split(key)

    weight = make_embedding_weight(k_w, vocab, d_model, padding_idx)
    x = jax.random.randint(k_x, (B, S), 0, vocab, dtype=jnp.int32)
    x = x.at[0, 0].set(padding_idx)   # make sure a padding token appears

    out = embeddings_forward(x, weight, d_model)
    out = jax.block_until_ready(out)

    # Reference (plain JAX) check of the PyTorch forward semantics.
    ref = jnp.take(weight, x, axis=0) * math.sqrt(d_model)
    assert out.shape == (B, S, d_model)
    assert jnp.allclose(out, ref, atol=1e-5, rtol=1e-5)

    print("KERNEL_OK")
</pallas_src>

<mosaic_0001>
module attributes {stable_mosaic.version = 11 : i64} {
  func.func @_embed_gather_kernel(%arg0: i32, %arg1: memref<16xi32, #tpu.memory_space<smem>>, %arg2: memref<64x128xf32, #tpu.memory_space<any>>, %arg3: memref<16x128xf32, #tpu.memory_space<vmem>>, %arg4: memref<!tpu.dma_semaphore, #tpu.memory_space<semaphore_mem>>) attributes {dimension_semantics = [#tpu.dimension_semantics<parallel>], iteration_bounds = array<i64: 1>, scalar_prefetch = 1 : i64, scratch_operands = 1 : i64, tpu.core_type = #tpu.core_type<tc>, window_params = [{}, {transform_indices = @transform_1, window_bounds = array<i64: 16, 128>}]} {
    %c16_i32 = arith.constant 16 : i32
    %0 = arith.muli %arg0, %c16_i32 : i32
    %c0_i32 = arith.constant 0 : i32
    %c16_i32_0 = arith.constant 16 : i32
    %1 = arith.addi %c0_i32, %c16_i32_0 : i32
    %c1_i32 = arith.constant 1 : i32
    scf.for %arg5 = %c0_i32 to %1 step %c1_i32  : i32 {
      %c1_i32_9 = arith.constant 1 : i32
      %7 = arith.muli %arg5, %c1_i32_9 : i32
      %c0_i32_10 = arith.constant 0 : i32
      %8 = arith.addi %c0_i32_10, %7 : i32
      %9 = arith.addi %0, %8 : i32
      %10 = arith.index_cast %9 : i32 to index
      %11 = memref.load %arg1[%10] : memref<16xi32, #tpu.memory_space<smem>>
      %c0_i32_11 = arith.constant 0 : i32
      %12 = tpu.memref_slice %arg2[%11, %c0_i32_11] : memref<64x128xf32, #tpu.memory_space<any>> -> memref<1x128xf32, #tpu.memory_space<any>>
      %c0_i32_12 = arith.constant 0 : i32
      %13 = tpu.memref_slice %arg3[%8, %c0_i32_12] : memref<16x128xf32, #tpu.memory_space<vmem>> -> memref<1x128xf32, #tpu.memory_space<vmem>>
      tpu.enqueue_dma source(%12 : memref<1x128xf32, #tpu.memory_space<any>>) target(%13 : memref<1x128xf32, #tpu.memory_space<vmem>>) target_semaphore(%arg4 : memref<!tpu.dma_semaphore, #tpu.memory_space<semaphore_mem>>)
    }
    %c16_i32_1 = arith.constant 16 : i32
    %c0_i32_2 = arith.constant 0 : i32
    %c16_i32_3 = arith.constant 16 : i32
    %2 = arith.addi %c0_i32_2, %c16_i32_3 : i32
    %c1_i32_4 = arith.constant 1 : i32
    scf.for %arg5 = %c0_i32_2 to %2 step %c1_i32_4  : i32 {
      %c1_i32_9 = arith.constant 1 : i32
      %7 = arith.muli %arg5, %c1_i32_9 : i32
      %c0_i32_10 = arith.constant 0 : i32
      %8 = arith.addi %c0_i32_10, %7 : i32
      %9 = arith.addi %0, %8 : i32
      %10 = arith.index_cast %9 : i32 to index
      %11 = memref.load %arg1[%10] : memref<16xi32, #tpu.memory_space<smem>>
      %c0_i32_11 = arith.constant 0 : i32
      %12 = tpu.memref_slice %arg2[%11, %c0_i32_11] : memref<64x128xf32, #tpu.memory_space<any>> -> memref<1x128xf32, #tpu.memory_space<any>>
      %c0_i32_12 = arith.constant 0 : i32
      %13 = tpu.memref_slice %arg3[%8, %c0_i32_12] : memref<16x128xf32, #tpu.memory_space<vmem>> -> memref<1x128xf32, #tpu.memory_space<vmem>>
      tpu.wait_dma2 semaphore(%arg4 : memref<!tpu.dma_semaphore, #tpu.memory_space<semaphore_mem>>) src(%12 : memref<1x128xf32, #tpu.memory_space<any>>) dst(%13 : memref<1x128xf32, #tpu.memory_space<vmem>>)
    }
    %c16_i32_5 = arith.constant 16 : i32
    %c0 = arith.constant 0 : index
    %c0_6 = arith.constant 0 : index
    %3 = vector.load %arg3[%c0, %c0_6] : memref<16x128xf32, #tpu.memory_space<vmem>>, vector<16x128xf32>
    %cst = arith.constant 5.65685415 : f32
    %4 = vector.broadcast %cst : f32 to vector<16x128xf32>
    %5 = arith.mulf %3, %4 : vector<16x128xf32>
    %c0_7 = arith.constant 0 : index
    %c0_8 = arith.constant 0 : index
    %6 = vector.load %arg3[%c0_7, %c0_8] : memref<16x128xf32, #tpu.memory_space<vmem>>, vector<16x128xf32>
    tpu.vector_store %arg3[%c0_7, %c0_8], %5 {strides = array<i32>} : memref<16x128xf32, #tpu.memory_space<vmem>>, vector<16x128xf32>,
    return
  }
  func.func @transform_1(%arg0: i32, %arg1: memref<16xi32, #tpu.memory_space<smem>>) -> (i32, i32) {
    %c0_i32 = arith.constant 0 : i32
    %c0_i32_0 = arith.constant 0 : i32
    return %arg0, %c0_i32 : i32, i32
  }
}

</mosaic_0001>

<llo_original>
// kernel: tpu_custom_call.1
$region0: #{tpu_custom_call.1}
  #allocation0 [shape = 'u32[]', space=smem, size = 0x4, offset = 0x4, fixed_abs, tag = 'smem constant byte address 0x4 - core index']
  #allocation1 [shape = 'u32[72,128]{1,0:T(1,128)}', space=vmem, size = 0x9000, scoped, tag = 'internal scratch']
  #allocation2 [shape = 's32[1]{0}', space=sflag, size = 0x4, scoped, tag = 'scratch operand']
  #allocation3 [shape = 's32[1]{0}', space=sflag, size = 0x4, scoped, tag = 'scoped memory for tpu_custom_call.1']
  #allocation4 [shape = 'u8[512]{0}', space=smem, size = 0x200, scoped, tag = 'prefetched SMEM operand 0']
  #allocation7 [shape = 's32[]', space=sflag, size = 0x4, offset = 0, fixed_abs, tag = 'sflag constant byte address 0x0 - dummy sync flag']
  #allocation8 [shape = 's32[]', space=sflag, size = 0x4, offset = 0, fixed_abs, tag = 'sflag constant byte address 0x0 - dummy sync flag']
  #allocation9 [shape = 'u32[]', space=smem, size = 0x4, offset = 0x44, fixed_abs, tag = 'smem constant byte address 0x44 - assertion arg 0']
  #allocation10 [shape = 'u32[]', space=smem, size = 0x4, offset = 0x48, fixed_abs, tag = 'smem constant byte address 0x48 - assertion arg 1']
  %s0 = inlined_call_operand.hbm [shape: s32[16], index: 0, kind: input, shape index: {}]
  %s1 = inlined_call_operand.hbm [shape: f32[64,128], index: 1, kind: input, shape index: {}]
  %s2 = inlined_call_operand.hbm [shape: f32[16,128], index: 2, kind: output, shape index: {}]
  %s3 = sld [smem:[#allocation0]]
  $region28: #{tpu_custom_call.1} parent=0
    _
  %s5 = ssub.s32 1, %s3
  %s6 = scalar_select 0, %s5, %s3
  %s8 = sshll.u32 %s0, 4
  %s9 = int_to_ptr.hbm [resolvable:$true] %s8
  %11 = dma.hbm_to_smem %s9, 16, [#allocation4], [#allocation3]
  %13 = dma.done [#allocation3], 16
  %14 = sfence
  $region1: #{tpu_custom_call.1} parent=0
    #allocation5 [shape = 'u8[8192]{0}', space=vmem, size = 0x2000, scoped, tag = 'output window, operand 0, single buffered']
    #allocation6 [shape = 's32[1]{0}', space=sflag, size = 0x4, scoped, tag = 'scoped memory for tpu_custom_call.1']
    %15 = vsyncpa [#allocation6], 0
    %s16 = smul.u32 0, 16
    loop: start=0, step=1, limit=16
    $region2: #{tpu_custom_call.1} parent=1 // loop_pre_header
      _
    $region3: #{tpu_custom_call.1} parent=1 // loop_header
      %s18 = sphi 0, %s22
      %p19 = scmp.ge.s32.totalorder %s18, 16
    $region4: #{tpu_custom_call.1} parent=1 // loop_header_branch
      %21 = sbr.rel (%p19) target = $region8
    $region5: #{tpu_custom_call.1} parent=1 // loop_body
      %s23 = sadd.s32 %s16, %s18
      %s24 = sld [smem:[#allocation4 + %s23]]
      %s25 = scalar_lea.hbm %s1, %s24
      %s26 = scalar_lea.vmem [#allocation5], %s18
      // Predicated region
      $region9: #{tpu_custom_call.1} parent=5 // pred_check
        _
      $region10: #{tpu_custom_call.1} parent=5 // pred_check_branch
        %28 = sbr.rel target = $region12
      $region11: #{tpu_custom_call.1} parent=5 // pred_region
        %29 = sst [smem:[#allocation9]] [#allocation8]
        %30 = sst [smem:[#allocation10]] [#allocation7]
      $region12: #{tpu_custom_call.1} parent=5 // pred_fallthru
        _
      %32 = shalt.err (0)
      %s34 = sshll.u32 %s25, 4
      %s35 = int_to_ptr.hbm [resolvable:$true] %s34
      %s36 = sshll.u32 %s26, 4
      %s37 = int_to_ptr.vmem [resolvable:$true] %s36
      %39 = dma.hbm_to_vmem [thread:$0]  %s35, 16, %s37, [#allocation2]
    $region6: #{tpu_custom_call.1} parent=1 // loop_footer
      %s22 = sadd.s32 1, %s18
    $region7: #{tpu_custom_call.1} parent=1 // loop_footer_branch
      %17 = sbr.rel target = $region3
    $region8: #{tpu_custom_call.1} parent=1 // loop_exit
      _
    loop: start=0, step=1, limit=16
    $region13: #{tpu_custom_call.1} parent=1 // loop_pre_header
      _
    $region14: #{tpu_custom_call.1} parent=1 // loop_header
      %s41 = sphi 0, %s45
      %p42 = scmp.ge.s32.totalorder %s41, 16
    $region15: #{tpu_custom_call.1} parent=1 // loop_header_branch
      %44 = sbr.rel (%p42) target = $region19
    $region16: #{tpu_custom_call.1} parent=1 // loop_body
      %s46 = sadd.s32 %s16, %s41
      %s47 = sld [smem:[#allocation4 + %s46]]
      %s48 = smul.u32 1, 1
      %s49 = sshll.u32 %s48, 4
      %50 = dma.done [#allocation2], %s49
    $region17: #{tpu_custom_call.1} parent=1 // loop_footer
      %s45 = sadd.s32 1, %s41
    $region18: #{tpu_custom_call.1} parent=1 // loop_footer_branch
      %40 = sbr.rel target = $region14
    $region19: #{tpu_custom_call.1} parent=1 // loop_exit
      _
    %v51 = vld [vmem:[#allocation5] sm:$0xff]
    %v52 = vld [vmem:[#allocation5 + $0x8] sm:$0xff]
    %v53 = vmul.f32 %v51, 5.656854
    %v54 = vmul.f32 %v52, 5.656854
    %55 = vst [vmem:[#allocation5] sm:$0xff] %v53
    %56 = vst [vmem:[#allocation5 + $0x8] sm:$0xff] %v54
    // Predicated region
    $region20: #{tpu_custom_call.1} parent=1 // pred_check
      _
    $region21: #{tpu_custom_call.1} parent=1 // pred_check_branch
      %58 = sbr.rel (0) target = $region23
    $region22: #{tpu_custom_call.1} parent=1 // pred_region
      %60 = vsyncadd [#allocation6], 0
      %s61 = sshll.u32 [#allocation5], 4
      %s62 = int_to_ptr.vmem [resolvable:$true] %s61
      %s63 = sshll.u32 %s2, 4
      %s64 = int_to_ptr.hbm [resolvable:$true] %s63
      %69 = dma.vmem_to_hbm [thread:$0]  %s62, 256, %s64, [#allocation6], 128, 128, 8
    $region23: #{tpu_custom_call.1} parent=1 // pred_fallthru
      _
    // Predicated region
    $region24: #{tpu_custom_call.1} parent=1 // pred_check
      _
    $region25: #{tpu_custom_call.1} parent=1 // pred_check_branch
      %71 = sbr.rel (0) target = $region27
    $region26: #{tpu_custom_call.1} parent=1 // pred_region
      %73 = dma.done [#allocation6], 256
    $region27: #{tpu_custom_call.1} parent=1 // pred_fallthru
      _
    %74 = vsyncpa [#allocation6], 1
  %75 = vsyncmov [#allocation2]
  %s76 = vpop.sfrf %75
  %p77 = scmp.eq.s32.totalorder %s76, 0
  %p78 = pneg %p77
  %80 = shalt.err (%p78)

</llo_original>
